<compile_context>
chip_gen: v6e
topology: v6e:2x2x1
jax: 0.10.0
libtpu: 0.0.40
codegen_flags: <defaults>
</compile_context>

<pallas_src>
import jax
import jax.numpy as jnp
from jax.experimental import pallas as pl
from jax.experimental.pallas import tpu as pltpu


# -----------------------------------------------------------------------------
# Kernel: one grid step = (batch tile i, hidden layer l)
# -----------------------------------------------------------------------------
def _make_mlp_kernel(resident_hidden):
    def kernel(x_ref, w_in_ref, b_in_ref,
               w_h_ref, b_h_ref,
               w_out_ref, b_out_ref,
               o_ref, h_ref):
        l = pl.program_id(1)
        last = pl.num_programs(1) - 1

        # Input layer: only on the first layer-step of each batch tile.
        @pl.when(l == 0)
        def _():
            h0 = jnp.dot(x_ref[...], w_in_ref[...],
                         preferred_element_type=jnp.float32)
            h_ref[...] = jnp.maximum(h0 + b_in_ref[...], 0.0).astype(h_ref.dtype)

        # Hidden layer l.  Resident: the whole (L, H, H) stack sits in VMEM and
        # is indexed by the layer program id.  Streamed: the BlockSpec already
        # delivered layer l as a (1, H, H) block.
        idx = l if resident_hidden else 0
        h = jnp.dot(h_ref[...], w_h_ref[idx],
                    preferred_element_type=jnp.float32)
        h_ref[...] = jnp.maximum(h + b_h_ref[idx], 0.0).astype(h_ref.dtype)

        # Output layer: only after the last hidden layer (lane-dense padded
        # slab; sliced back to O / B in the wrapper).
        @pl.when(l == last)
        def _():
            out = jnp.dot(h_ref[...], w_out_ref[...],
                          preferred_element_type=jnp.float32)
            o_ref[...] = (out + b_out_ref[...]).astype(o_ref.dtype)

    return kernel


# -----------------------------------------------------------------------------
# Wrapper helpers
# -----------------------------------------------------------------------------
def _round_up(x, m):
    return (x + m - 1) // m * m


def _vmem_capacity_bytes():
    """Physical per-core VMEM; conservative 64 MiB (v7x) fallback if unknown."""
    try:
        cap = getattr(pltpu.get_tpu_info(), "vmem_capacity_bytes", None)
        if cap:
            return int(cap)
    except Exception:
        pass
    return 64 * 1024 * 1024


def _vmem_bytes(tb, F, H, O_pad, L, resident, w_isz, out_isz):
    """Estimated resident VMEM for one grid step, pipeline buffers included.

    Constant-index blocks are only DMA'd once but still get the default second
    pipeline buffer, hence the factor 2 everywhere (honest accounting)."""
    b = 0
    b += 2 * tb * F * w_isz                        # x tile (double-buffered)
    b += 2 * (F * H * w_isz + H * 4)               # input-layer weight/bias
    if resident:
        b += 2 * L * (H * H * w_isz + H * 4)       # resident hidden stack
    else:
        b += 2 * (H * H * w_isz + H * 4)           # streamed hidden block
    b += 2 * (H * O_pad * w_isz + O_pad * 4)       # output-layer weight/bias
    b += tb * H * w_isz                            # carried activation scratch
    b += 2 * tb * O_pad * out_isz                  # output tile
    return b


_TILE_CANDIDATES = (1024, 768, 512, 384, 256, 128)


def _choose_tiling(B, target_tb, stream_weights, fits_vmem):
    """Pick (tile_b, padded_B).

    tile_b is a multiple of 8, divides padded_B, and for large batches is never
    below 128 rows (MXU-friendly); we also prefer >= 2 batch tiles so the
    "parallel" batch axis can be split across v7x's two TensorCores."""
    if B <= 128:
        # Genuinely small batch: a single sublane-rounded tile.  Padding to
        # 128/256 rows would only add dead rows (MXU weight push dominates).
        tb = _round_up(max(B, 8), 8)
        return tb, tb
    b128 = _round_up(B, 128)
    cands = [t for t in _TILE_CANDIDATES
             if t <= target_tb and t <= b128 and fits_vmem(t)]
    if not cands:
        cands = [128]
    if stream_weights:
        # Weights are re-streamed once per batch tile -> biggest tile wins.
        tb = cands[0]
    else:
        # Resident weights: minimise padded rows; prefer a tile dividing the
        # 128-padded batch.
        div = [t for t in cands if b128 % t == 0]
        tb = div[0] if div else cands[0]
    B_pad = _round_up(B, tb)
    # Megacore: prefer at least 2 batch tiles on the "parallel" axis.
    if B_pad // tb < 2 and B_pad >= 256:
        tb = max(128, _round_up(B_pad // 2, 128))
        B_pad = _round_up(B, tb)
        if B_pad // tb < 2:
            B_pad = 2 * tb
    return tb, B_pad


# -----------------------------------------------------------------------------
# References (match the PyTorch forward)
# -----------------------------------------------------------------------------
def reference_forward(x, params, *, layer_count):
    """Pure-JAX f32 reference matching the PyTorch forward."""
    h = jnp.maximum(x @ params["w_in"] + params["b_in"], 0.0)
    for i in range(layer_count):
        h = jnp.maximum(h @ params["w_h"][i] + params["b_h"][i], 0.0)
    return h @ params["w_out"] + params["b_out"]


def reference_forward_compute_dtype(x, params, *, layer_count, compute_dtype):
    """Reference mimicking the kernel's low-precision matmuls (f32 accumulate)."""
    def mm(a, w):
        return jnp.dot(a.astype(compute_dtype), w.astype(compute_dtype),
                       preferred_element_type=jnp.float32)
    h = jnp.maximum(mm(x, params["w_in"]) + params["b_in"], 0.0)
    for i in range(layer_count):
        h = jnp.maximum(mm(h, params["w_h"][i]) + params["b_h"][i], 0.0)
    return mm(h, params["w_out"]) + params["b_out"]


# -----------------------------------------------------------------------------
# Main wrapper
# -----------------------------------------------------------------------------
def classifier_model_relu_forward(x, params, *, layer_count,
                                  compute_dtype=jnp.bfloat16,
                                  out_dtype=jnp.float32,
                                  weight_residency="auto",
                                  tile_b=None,
                                  force_pallas=False):
    """x: [B, input_features]; params: dict of weights (see init_params)."""
    w_in, b_in = params["w_in"], params["b_in"]
    w_h, b_h = params["w_h"], params["b_h"]
    w_out, b_out = params["w_out"], params["b_out"]

    B, F = x.shape
    H = w_in.shape[1]
    O = w_out.shape[1]
    L = w_h.shape[0]
    assert L == layer_count

    # Tiny problems (or no hidden layers): kernel fixed overhead dominates,
    # plain XLA wins.  The demo forces the Pallas path via force_pallas=True.
    # TODO(synk): layer_count == 0 has no hidden-weight stack to iterate over;
    # it is served by plain XLA instead of a dedicated 2-matmul kernel.
    tiny = (B * H * max(F, H) * max(layer_count, 1)) < (1 << 18)
    if layer_count == 0 or (tiny and not force_pallas):
        return reference_forward(x, params, layer_count=layer_count)

    cd = jnp.dtype(compute_dtype)
    w_isz = cd.itemsize
    out_isz = jnp.dtype(out_dtype).itemsize

    # Lane-dense output: pad O to a multiple of 128 with zero weight/bias cols.
    O_pad = _round_up(O, 128)
    if O_pad != O:
        w_out = jnp.pad(w_out, ((0, 0), (0, O_pad - O)))
        b_out = jnp.pad(b_out, ((0, 0), (0, O_pad - O)))

    # ---- VMEM-aware residency + batch-tiling decisions ----------------------
    vmem_cap = _vmem_capacity_bytes()
    big_vmem = vmem_cap >= 96 * 1024 * 1024       # 128 MiB v5e/v6e vs 64 MiB v7x
    resident_budget = (40 if big_vmem else 20) * 1024 * 1024
    vmem_budget = int(vmem_cap * 0.7)             # headroom for mosaic scratch

    def fits(tb, resident):
        return _vmem_bytes(tb, F, H, O_pad, L, resident, w_isz, out_isz) <= vmem_budget

    if weight_residency == "auto":
        resident = _vmem_bytes(128, F, H, O_pad, L, True, w_isz, out_isz) <= resident_budget
    else:
        resident = (weight_residency == "resident")

    # Streamed weights need a tall batch tile to clear the bf16 HBM roofline
    # (arith intensity == tb FLOPs / weight byte); resident weights only need
    # MXU-friendly tiles.
    target_tb = 512 if resident else (1024 if big_vmem else 512)
    if tile_b is None:
        tb, B_pad = _choose_tiling(B, target_tb, not resident,
                                   lambda t: fits(t, resident))
    else:
        tb = tile_b
        B_pad = _round_up(B, tb)
    assert tb % 8 == 0 and B_pad % tb == 0
    nb = B_pad // tb

    # Zero-pad the batch so every tile is full (padded rows are sliced off).
    x_pad = x if B_pad == B else jnp.pad(x, ((0, B_pad - B), (0, 0)))

    # bf16 weights/activations on the MXU; biases stay f32 (added to f32 acc).
    x_c = x_pad.astype(cd)
    w_in_c = w_in.astype(cd)
    w_h_c = w_h.astype(cd)
    w_out_c = w_out.astype(cd)
    b_in_f = b_in.astype(jnp.float32)
    b_h_f = b_h.astype(jnp.float32)
    b_out_f = b_out.astype(jnp.float32)

    # Scheduler hint: constant / resident weight blocks are fetched once;
    # streamed hidden weights are re-fetched once per batch tile.
    flops = 2 * B_pad * (F * H + L * H * H + H * O_pad)
    hidden_fetches = 1 if resident else nb
    bytes_accessed = (
        B_pad * F * w_isz                              # x
        + (F * H + H * O_pad) * w_isz                  # in/out layer weights (once)
        + hidden_fetches * L * H * H * w_isz           # hidden stack
        + (H + L * H + O_pad) * 4                      # biases
        + B_pad * O_pad * out_isz)                     # output
    cost = pl.CostEstimate(flops=int(flops), transcendentals=0,
                           bytes_accessed=int(bytes_accessed))

    # Raise the scoped VMEM limit only when needed; never above ~85% of the
    # physical per-core VMEM (64 MiB on v7x, 128 MiB on v5e/v6e).
    vmem_need = _vmem_bytes(tb, F, H, O_pad, L, resident, w_isz, out_isz)
    vmem_limit = None
    if vmem_need > 12 * 1024 * 1024:
        vmem_limit = min(max(int(vmem_need * 3 // 2), 32 * 1024 * 1024),
                         int(vmem_cap * 0.85))

    if resident:
        w_h_spec = pl.BlockSpec((L, H, H), lambda i, l: (0, 0, 0))   # resident stack
        b_h_spec = pl.BlockSpec((L, 1, H), lambda i, l: (0, 0, 0))
    else:
        w_h_spec = pl.BlockSpec((1, H, H), lambda i, l: (l, 0, 0))   # streamed per layer
        b_h_spec = pl.BlockSpec((1, 1, H), lambda i, l: (l, 0, 0))

    out_padded = pl.pallas_call(
        _make_mlp_kernel(resident),
        out_shape=jax.ShapeDtypeStruct((B_pad, O_pad), out_dtype),
        grid_spec=pltpu.PrefetchScalarGridSpec(
            num_scalar_prefetch=0,
            grid=(nb, L),
            in_specs=[
                pl.BlockSpec((tb, F), lambda i, l: (i, 0)),      # x tile (layer-invariant)
                pl.BlockSpec((F, H), lambda i, l: (0, 0)),       # input-layer weight
                pl.BlockSpec((1, H), lambda i, l: (0, 0)),       # input-layer bias
                w_h_spec,                                        # hidden weights
                b_h_spec,                                        # hidden biases
                pl.BlockSpec((H, O_pad), lambda i, l: (0, 0)),   # output-layer weight
                pl.BlockSpec((1, O_pad), lambda i, l: (0, 0)),   # output-layer bias
            ],
            out_specs=pl.BlockSpec((tb, O_pad), lambda i, l: (i, 0)),
            scratch_shapes=[pltpu.VMEM((tb, H), cd)],            # bf16 carried activation
        ),
        compiler_params=pltpu.CompilerParams(
            dimension_semantics=("parallel", "arbitrary"),
            vmem_limit_bytes=vmem_limit),
        cost_estimate=cost,
    )(x_c, w_in_c, b_in_f, w_h_c, b_h_f, w_out_c, b_out_f)

    out = out_padded
    if B_pad != B:
        out = out[:B]
    if O_pad != O:
        out = out[:, :O]
    return out


def init_params(key, input_features, output_features, hidden_units, layer_count):
    """Deterministic synthetic parameters (shapes match the PyTorch module)."""
    ks = jax.random.split(key, 6)
    scale_in = 1.0 / jnp.sqrt(input_features)
    scale_h = 1.0 / jnp.sqrt(hidden_units)
    return {
        "w_in": jax.random.uniform(ks[0], (input_features, hidden_units),
                                   jnp.float32, -scale_in, scale_in),
        "b_in": jax.random.uniform(ks[1], (1, hidden_units),
                                   jnp.float32, -scale_in, scale_in),
        "w_h": jax.random.uniform(ks[2], (layer_count, hidden_units, hidden_units),
                                  jnp.float32, -scale_h, scale_h),
        "b_h": jax.random.uniform(ks[3], (layer_count, 1, hidden_units),
                                  jnp.float32, -scale_h, scale_h),
        "w_out": jax.random.uniform(ks[4], (hidden_units, output_features),
                                    jnp.float32, -scale_h, scale_h),
        "b_out": jax.random.uniform(ks[5], (1, output_features),
                                    jnp.float32, -scale_h, scale_h),
    }


if __name__ == "__main__":
    key = jax.random.PRNGKey(0)
    kx, kp, kx2, kp2 = jax.random.split(key, 4)

    # --- Case 1: module-sized demo (resident hidden stack, single small tile).
    batch, input_features, hidden_units, output_features, layer_count = 8, 32, 32, 4, 2
    x = jax.random.normal(kx, (batch, input_features), jnp.float32)
    params = init_params(kp, input_features, output_features,
                         hidden_units, layer_count)

    out = classifier_model_relu_forward(x, params, layer_count=layer_count,
                                        force_pallas=True)
    out = jax.block_until_ready(out)
    assert out.shape == (batch, output_features)

    ref_bf16 = reference_forward_compute_dtype(
        x, params, layer_count=layer_count, compute_dtype=jnp.bfloat16)
    assert jnp.allclose(out, ref_bf16, atol=2e-3, rtol=2e-3)
    ref_f32 = reference_forward(x, params, layer_count=layer_count)
    assert jnp.allclose(out, ref_f32, atol=5e-2, rtol=5e-2)

    # --- Case 2: same shapes with streamed hidden weights (exercise that path).
    out_s = classifier_model_relu_forward(x, params, layer_count=layer_count,
                                          weight_residency="stream",
                                          force_pallas=True)
    out_s = jax.block_until_ready(out_s)
    assert jnp.allclose(out_s, ref_bf16, atol=2e-3, rtol=2e-3)

    # --- Case 3: non-tile batch -> zero padding + >= 2 batch tiles.
    batch2, f2, h2, o2, l2 = 200, 64, 128, 10, 3
    x2 = jax.random.normal(kx2, (batch2, f2), jnp.float32)
    params2 = init_params(kp2, f2, o2, h2, l2)
    out2 = classifier_model_relu_forward(x2, params2, layer_count=l2,
                                         force_pallas=True)
    out2 = jax.block_until_ready(out2)
    assert out2.shape == (batch2, o2)
    ref2 = reference_forward_compute_dtype(
        x2, params2, layer_count=l2, compute_dtype=jnp.bfloat16)
    assert jnp.allclose(out2, ref2, atol=5e-3, rtol=5e-3)

    print("KERNEL_OK")
</pallas_src>

<mosaic_0001>
module attributes {stable_mosaic.version = 11 : i64} {
  func.func @kernel(%arg0: i32, %arg1: i32, %arg2: memref<8x32xbf16, #tpu.memory_space<vmem>>, %arg3: memref<32x32xbf16, #tpu.memory_space<vmem>>, %arg4: memref<1x32xf32, #tpu.memory_space<vmem>>, %arg5: memref<2x32x32xbf16, #tpu.memory_space<vmem>>, %arg6: memref<2x1x32xf32, #tpu.memory_space<vmem>>, %arg7: memref<32x128xbf16, #tpu.memory_space<vmem>>, %arg8: memref<1x128xf32, #tpu.memory_space<vmem>>, %arg9: memref<8x128xf32, #tpu.memory_space<vmem>>, %arg10: memref<8x32xbf16, #tpu.memory_space<vmem>>) attributes {dimension_semantics = [#tpu.dimension_semantics<parallel>, #tpu.dimension_semantics<arbitrary>], iteration_bounds = array<i64: 1, 2>, scalar_prefetch = 0 : i64, scratch_operands = 1 : i64, tpu.core_type = #tpu.core_type<tc>, window_params = [{transform_indices = @transform_0, window_bounds = array<i64: 8, 32>}, {pipeline_mode = #tpu.pipeline_mode<synchronous>, transform_indices = @transform_1, window_bounds = array<i64: 32, 32>}, {pipeline_mode = #tpu.pipeline_mode<synchronous>, transform_indices = @transform_2, window_bounds = array<i64: 1, 32>}, {pipeline_mode = #tpu.pipeline_mode<synchronous>, transform_indices = @transform_3, window_bounds = array<i64: 2, 32, 32>}, {pipeline_mode = #tpu.pipeline_mode<synchronous>, transform_indices = @transform_4, window_bounds = array<i64: 2, 1, 32>}, {pipeline_mode = #tpu.pipeline_mode<synchronous>, transform_indices = @transform_5, window_bounds = array<i64: 32, 128>}, {pipeline_mode = #tpu.pipeline_mode<synchronous>, transform_indices = @transform_6, window_bounds = array<i64: 1, 128>}, {transform_indices = @transform_7, window_bounds = array<i64: 8, 128>}]} {
    %c0_i32 = arith.constant 0 : i32
    %0 = arith.cmpi eq, %arg1, %c0_i32 : i32
    %1 = arith.extui %0 : i1 to i32
    %c0_i32_0 = arith.constant 0 : i32
    %2 = arith.cmpi ne, %1, %c0_i32_0 : i32
    scf.if %2 {
      %c0_10 = arith.constant 0 : index
      %c0_11 = arith.constant 0 : index
      %20 = vector.load %arg2[%c0_10, %c0_11] : memref<8x32xbf16, #tpu.memory_space<vmem>>, vector<8x32xbf16>
      %c0_12 = arith.constant 0 : index
      %c0_13 = arith.constant 0 : index
      %21 = vector.load %arg3[%c0_12, %c0_13] : memref<32x32xbf16, #tpu.memory_space<vmem>>, vector<32x32xbf16>
      %cst_14 = arith.constant dense<0.000000e+00> : vector<8x32xf32>
      %22 = tpu.matmul %20, %21, %cst_14 {dimension_numbers = #tpu.dot_dimension_numbers<[1], [0], [0], [1], [0, 0, 1, 1], [], []>} : vector<8x32xbf16>, vector<32x32xbf16>, vector<8x32xf32> -> vector<8x32xf32>
      %c0_15 = arith.constant 0 : index
      %c0_16 = arith.constant 0 : index
      %23 = vector.load %arg4[%c0_15, %c0_16] : memref<1x32xf32, #tpu.memory_space<vmem>>, vector<1x32xf32>
      %24 = vector.broadcast %23 : vector<1x32xf32> to vector<8x32xf32>
      %25 = arith.addf %22, %24 : vector<8x32xf32>
      %cst_17 = arith.constant 0.000000e+00 : f32
      %26 = vector.broadcast %cst_17 : f32 to vector<8x32xf32>
      %27 = arith.maximumf %25, %26 : vector<8x32xf32>
      %28 = arith.truncf %27 : vector<8x32xf32> to vector<8x32xbf16>
      %c0_18 = arith.constant 0 : index
      %c0_19 = arith.constant 0 : index
      %29 = vector.load %arg10[%c0_18, %c0_19] : memref<8x32xbf16, #tpu.memory_space<vmem>>, vector<8x32xbf16>
      tpu.vector_store %arg10[%c0_18, %c0_19], %28 {strides = array<i32>} : memref<8x32xbf16, #tpu.memory_space<vmem>>, vector<8x32xbf16>,
    } else {
    }
    %c0 = arith.constant 0 : index
    %c0_1 = arith.constant 0 : index
    %3 = vector.load %arg10[%c0, %c0_1] : memref<8x32xbf16, #tpu.memory_space<vmem>>, vector<8x32xbf16>
    %4 = arith.index_cast %arg1 : i32 to index
    %c0_2 = arith.constant 0 : index
    %c0_3 = arith.constant 0 : index
    %5 = vector.load %arg5[%4, %c0_2, %c0_3] : memref<2x32x32xbf16, #tpu.memory_space<vmem>>, vector<1x32x32xbf16>
    %6 = vector.shape_cast %5 : vector<1x32x32xbf16> to vector<32x32xbf16>
    %cst = arith.constant dense<0.000000e+00> : vector<8x32xf32>
    %7 = tpu.matmul %3, %6, %cst {dimension_numbers = #tpu.dot_dimension_numbers<[1], [0], [0], [1], [0, 0, 1, 1], [], []>} : vector<8x32xbf16>, vector<32x32xbf16>, vector<8x32xf32> -> vector<8x32xf32>
    %8 = arith.index_cast %arg1 : i32 to index
    %c0_4 = arith.constant 0 : index
    %c0_5 = arith.constant 0 : index
    %9 = vector.load %arg6[%8, %c0_4, %c0_5] : memref<2x1x32xf32, #tpu.memory_space<vmem>>, vector<1x1x32xf32>
    %10 = vector.shape_cast %9 : vector<1x1x32xf32> to vector<1x32xf32>
    %11 = vector.broadcast %10 : vector<1x32xf32> to vector<8x32xf32>
    %12 = arith.addf %7, %11 : vector<8x32xf32>
    %cst_6 = arith.constant 0.000000e+00 : f32
    %13 = vector.broadcast %cst_6 : f32 to vector<8x32xf32>
    %14 = arith.maximumf %12, %13 : vector<8x32xf32>
    %15 = arith.truncf %14 : vector<8x32xf32> to vector<8x32xbf16>
    %c0_7 = arith.constant 0 : index
    %c0_8 = arith.constant 0 : index
    %16 = vector.load %arg10[%c0_7, %c0_8] : memref<8x32xbf16, #tpu.memory_space<vmem>>, vector<8x32xbf16>
    tpu.vector_store %arg10[%c0_7, %c0_8], %15 {strides = array<i32>} : memref<8x32xbf16, #tpu.memory_space<vmem>>, vector<8x32xbf16>,
    %c1_i32 = arith.constant 1 : i32
    %17 = arith.cmpi eq, %arg1, %c1_i32 : i32
    %18 = arith.extui %17 : i1 to i32
    %c0_i32_9 = arith.constant 0 : i32
    %19 = arith.cmpi ne, %18, %c0_i32_9 : i32
    scf.if %19 {
      %c0_10 = arith.constant 0 : index
      %c0_11 = arith.constant 0 : index
      %20 = vector.load %arg10[%c0_10, %c0_11] : memref<8x32xbf16, #tpu.memory_space<vmem>>, vector<8x32xbf16>
      %c0_12 = arith.constant 0 : index
      %c0_13 = arith.constant 0 : index
      %21 = vector.load %arg7[%c0_12, %c0_13] : memref<32x128xbf16, #tpu.memory_space<vmem>>, vector<32x128xbf16>
      %cst_14 = arith.constant dense<0.000000e+00> : vector<8x128xf32>
      %22 = tpu.matmul %20, %21, %cst_14 {dimension_numbers = #tpu.dot_dimension_numbers<[1], [0], [0], [1], [0, 0, 1, 1], [], []>} : vector<8x32xbf16>, vector<32x128xbf16>, vector<8x128xf32> -> vector<8x128xf32>
      %c0_15 = arith.constant 0 : index
      %c0_16 = arith.constant 0 : index
      %23 = vector.load %arg8[%c0_15, %c0_16] : memref<1x128xf32, #tpu.memory_space<vmem>>, vector<1x128xf32>
      %24 = vector.broadcast %23 : vector<1x128xf32> to vector<8x128xf32>
      %25 = arith.addf %22, %24 : vector<8x128xf32>
      %c0_17 = arith.constant 0 : index
      %c0_18 = arith.constant 0 : index
      %26 = vector.load %arg9[%c0_17, %c0_18] : memref<8x128xf32, #tpu.memory_space<vmem>>, vector<8x128xf32>
      tpu.vector_store %arg9[%c0_17, %c0_18], %25 {strides = array<i32>} : memref<8x128xf32, #tpu.memory_space<vmem>>, vector<8x128xf32>,
    } else {
    }
    return
  }
  func.func @transform_0(%arg0: i32, %arg1: i32) -> (i32, i32) {
    %c0_i32 = arith.constant 0 : i32
    %c0_i32_0 = arith.constant 0 : i32
    return %arg0, %c0_i32 : i32, i32
  }
  func.func @transform_1(%arg0: i32, %arg1: i32) -> (i32, i32) {
    %c0_i32 = arith.constant 0 : i32
    %c0_i32_0 = arith.constant 0 : i32
    %c0_i32_1 = arith.constant 0 : i32
    return %c0_i32, %c0_i32_0 : i32, i32
  }
  func.func @transform_2(%arg0: i32, %arg1: i32) -> (i32, i32) {
    %c0_i32 = arith.constant 0 : i32
    %c0_i32_0 = arith.constant 0 : i32
    %c0_i32_1 = arith.constant 0 : i32
    return %c0_i32, %c0_i32_0 : i32, i32
  }
  func.func @transform_3(%arg0: i32, %arg1: i32) -> (i32, i32, i32) {
    %c0_i32 = arith.constant 0 : i32
    %c0_i32_0 = arith.constant 0 : i32
    %c0_i32_1 = arith.constant 0 : i32
    %c0_i32_2 = arith.constant 0 : i32
    return %c0_i32, %c0_i32_0, %c0_i32_1 : i32, i32, i32
  }
  func.func @transform_4(%arg0: i32, %arg1: i32) -> (i32, i32, i32) {
    %c0_i32 = arith.constant 0 : i32
    %c0_i32_0 = arith.constant 0 : i32
    %c0_i32_1 = arith.constant 0 : i32
    %c0_i32_2 = arith.constant 0 : i32
    return %c0_i32, %c0_i32_0, %c0_i32_1 : i32, i32, i32
  }
  func.func @transform_5(%arg0: i32, %arg1: i32) -> (i32, i32) {
    %c0_i32 = arith.constant 0 : i32
    %c0_i32_0 = arith.constant 0 : i32
    %c0_i32_1 = arith.constant 0 : i32
    return %c0_i32, %c0_i32_0 : i32, i32
  }
  func.func @transform_6(%arg0: i32, %arg1: i32) -> (i32, i32) {
    %c0_i32 = arith.constant 0 : i32
    %c0_i32_0 = arith.constant 0 : i32
    %c0_i32_1 = arith.constant 0 : i32
    return %c0_i32, %c0_i32_0 : i32, i32
  }
  func.func @transform_7(%arg0: i32, %arg1: i32) -> (i32, i32) {
    %c0_i32 = arith.constant 0 : i32
    %c0_i32_0 = arith.constant 0 : i32
    return %arg0, %c0_i32 : i32, i32
  }
}

</mosaic_0001>

<llo_original>
// kernel: tpu_custom_call.1
$region0: #{tpu_custom_call.1}
  #allocation0 [shape = 'u32[]', space=smem, size = 0x4, offset = 0x4, fixed_abs, tag = 'smem constant byte address 0x4 - core index']
  #allocation1 [shape = 'u32[144,128]{1,0:T(1,128)}', space=vmem, size = 0x12000, scoped, tag = 'internal scratch']
  #allocation2 [shape = 'bf16[8,32]{1,0:T(8,128)(2,1)}', space=vmem, size = 0x800, scoped, tag = 'scratch operand']
  %s0 = inlined_call_operand.hbm [shape: bf16[8,32], index: 0, kind: input, shape index: {}]
  %s1 = inlined_call_operand.hbm [shape: bf16[32,32], index: 1, kind: input, shape index: {}]
  %s2 = inlined_call_operand.vmem [shape: f32[1,32], index: 2, kind: input, shape index: {}]
  %s3 = inlined_call_operand.hbm [shape: bf16[2,32,32], index: 3, kind: input, shape index: {}]
  %s4 = inlined_call_operand.vmem [shape: f32[2,1,32], index: 4, kind: input, shape index: {}]
  %s5 = inlined_call_operand.hbm [shape: bf16[32,128], index: 5, kind: input, shape index: {}]
  %s6 = inlined_call_operand.vmem [shape: f32[1,128], index: 6, kind: input, shape index: {}]
  %s7 = inlined_call_operand.hbm [shape: f32[8,128], index: 7, kind: output, shape index: {}]
  %s8 = sld [smem:[#allocation0]]
  $region85: #{tpu_custom_call.1} parent=0
    _
  %s10 = ssub.s32 1, %s8
  %s11 = scalar_select 0, %s10, %s8
  $region1: #{tpu_custom_call.1} parent=0
    #allocation3 [shape = 'u8[2048]{0}', space=vmem, size = 0x800, scoped, tag = 'input window, operand 0, single buffered']
    #allocation4 [shape = 's32[2]{0}', space=sflag, size = 0x8, scoped, tag = 'scoped memory for tpu_custom_call.1']
    #allocation5 [shape = 's32[2]{0}', space=sflag, size = 0x8, scoped, tag = 'scoped memory for tpu_custom_call.1']
    #allocation6 [shape = 'u8[8192]{0}', space=vmem, size = 0x2000, scoped, tag = 'input window, operand 1, single buffered']
    #allocation7 [shape = 's32[1]{0}', space=sflag, size = 0x4, scoped, tag = 'scoped memory for tpu_custom_call.1']
    #allocation8 [shape = 'u8[16384]{0}', space=vmem, size = 0x4000, scoped, tag = 'input window, operand 3, single buffered']
    #allocation9 [shape = 'u8[8192]{0}', space=vmem, size = 0x2000, scoped, tag = 'input window, operand 5, single buffered']
    #allocation10 [shape = 's32[1]{0}', space=sflag, size = 0x4, scoped, tag = 'scoped memory for tpu_custom_call.1']
    #allocation11 [shape = 'u8[4096]{0}', space=vmem, size = 0x1000, scoped, tag = 'output window, operand 0, single buffered']
    %12 = vsyncpa [#allocation4], 0
    %13 = vsyncpa [#allocation7], 0
    %14 = vsyncpa [#allocation10], 0
    %15 = vsyncpa [#allocation5], 0
    loop: start=0, step=1, limit=4
    $region2: #{tpu_custom_call.1} parent=1 // loop_pre_header
      _
    $region3: #{tpu_custom_call.1} parent=1 // loop_header
      %s17 = sphi 0, %s21
      %p18 = scmp.ge.s32.totalorder %s17, 4
      %s24 = sphi 0, %s36
      %s25 = sphi 0, %s32
      %s26 = sphi 0, %s24
      %s27 = sphi 0, %s25
      %s28 = sphi 0, %s26
      %s29 = sphi 0, %s27
      %s39 = sphi 0, %s41
      %s42 = sphi 0, %s39
      %s43 = sphi 0, %s42
      %s59 = sphi 0, %s43
      %s63 = sphi 0, %s63
      %s65 = sphi 0, %s63
      %s66 = sphi 0, %s65
      %s80 = sphi 0, %s66
      %s84 = sphi 0, %s84
      %s86 = sphi 0, %s84
      %s87 = sphi 0, %s86
      %s101 = sphi 0, %s87
      %s105 = sphi 0, %s105
      %s107 = sphi 0, %s105
      %s108 = sphi 0, %s107
      %s122 = sphi 0, %s108
      %s126 = sphi 0, %s126
      %s128 = sphi 0, %s126
      %s129 = sphi 0, %s128
      %s143 = sphi 0, %s129
      %s147 = sphi 0, %s147
      %s149 = sphi 0, %s147
      %s150 = sphi 0, %s149
      %s164 = sphi 0, %s150
      %s168 = sphi 0, %s168
      %s170 = sphi 0, %s168
      %s171 = sphi 0, %s170
      %s185 = sphi 0, %s171
      %s191 = sphi 0, %s193
      %s194 = sphi 0, %s191
      %s195 = sphi 0, %s194
      %s211 = sphi 0, %s195
    $region4: #{tpu_custom_call.1} parent=1 // loop_header_branch
      %20 = sbr.rel (%p18) target = $region8
    $region5: #{tpu_custom_call.1} parent=1 // loop_body
      %s22 = ssub.s32 %s17, 1
      %s23 = ssub.s32 %s17, 2
      %s30 = sadd.s32 1, %s25
      %p31 = scmp.ge.s32.totalorder %s30, 2
      %s32 = scalar_select %p31, 0, %s30
      %s33 = sadd.s32 1, %s24
      %s34 = scalar_select %p31, %s33, %s24
      %p35 = scmp.ge.s32.totalorder %s34, 1
      %s36 = scalar_select %p35, 0, %s34
      %s37 = ssub.s32 %s24, %s36
      %p38 = scmp.eq.s32.totalorder %s37, 0
      %s40 = sadd.s32 %s39, 1
      %s41 = scalar_select %p38, %s39, %s40
      %p44 = pneg %p38
      %p45 = scmp.eq.s32.totalorder %s17, 1
      %p46 = por %p44, %p45
      %p47 = scmp.ne.s32.totalorder %s39, %s42
      %p48 = scmp.eq.s32.totalorder %s17, 0
      %p49 = por %p47, %p48
      %p50 = scmp.ne.s32.totalorder %s39, %s42
      %p51 = scmp.eq.s32.totalorder %s22, 1
      %p52 = por %p50, %p51
      %p53 = scmp.ne.s32.totalorder %s42, %s43
      %p54 = scmp.eq.s32.totalorder %s22, 0
      %p55 = por %p53, %p54
      %p56 = scmp.ne.s32.totalorder %s42, %s43
      %p57 = scmp.eq.s32.totalorder %s23, 1
      %p58 = por %p56, %p57
      %p60 = scmp.ne.s32.totalorder %s43, %s59
      %p61 = scmp.eq.s32.totalorder %s23, 0
      %p62 = por %p60, %p61
      %s64 = sadd.s32 %s63, 1
      %p67 = scmp.eq.s32.totalorder %s17, 1
      %p68 = scmp.ne.s32.totalorder %s63, %s65
      %p69 = scmp.eq.s32.totalorder %s17, 0
      %p70 = por %p68, %p69
      %p71 = scmp.ne.s32.totalorder %s63, %s65
      %p72 = scmp.eq.s32.totalorder %s22, 1
      %p73 = por %p71, %p72
      %p74 = scmp.ne.s32.totalorder %s65, %s66
      %p75 = scmp.eq.s32.totalorder %s22, 0
      %p76 = por %p74, %p75
      %p77 = scmp.ne.s32.totalorder %s65, %s66
      %p78 = scmp.eq.s32.totalorder %s23, 1
      %p79 = por %p77, %p78
      %p81 = scmp.ne.s32.totalorder %s66, %s80
      %p82 = scmp.eq.s32.totalorder %s23, 0
      %p83 = por %p81, %p82
      %s85 = sadd.s32 %s84, 1
      %p88 = scmp.eq.s32.totalorder %s17, 1
      %p89 = scmp.ne.s32.totalorder %s84, %s86
      %p90 = scmp.eq.s32.totalorder %s17, 0
      %p91 = por %p89, %p90
      %p92 = scmp.ne.s32.totalorder %s84, %s86
      %p93 = scmp.eq.s32.totalorder %s22, 1
      %p94 = por %p92, %p93
      %p95 = scmp.ne.s32.totalorder %s86, %s87
      %p96 = scmp.eq.s32.totalorder %s22, 0
      %p97 = por %p95, %p96
      %p98 = scmp.ne.s32.totalorder %s86, %s87
      %p99 = scmp.eq.s32.totalorder %s23, 1
      %p100 = por %p98, %p99
      %p102 = scmp.ne.s32.totalorder %s87, %s101
      %p103 = scmp.eq.s32.totalorder %s23, 0
      %p104 = por %p102, %p103
      %s106 = sadd.s32 %s105, 1
      %p109 = scmp.eq.s32.totalorder %s17, 1
      %p110 = scmp.ne.s32.totalorder %s105, %s107
      %p111 = scmp.eq.s32.totalorder %s17, 0
      %p112 = por %p110, %p111
      %p113 = scmp.ne.s32.totalorder %s105, %s107
      %p114 = scmp.eq.s32.totalorder %s22, 1
      %p115 = por %p113, %p114
      %p116 = scmp.ne.s32.totalorder %s107, %s108
      %p117 = scmp.eq.s32.totalorder %s22, 0
      %p118 = por %p116, %p117
      %p119 = scmp.ne.s32.totalorder %s107, %s108
      %p120 = scmp.eq.s32.totalorder %s23, 1
      %p121 = por %p119, %p120
      %p123 = scmp.ne.s32.totalorder %s108, %s122
      %p124 = scmp.eq.s32.totalorder %s23, 0
      %p125 = por %p123, %p124
      %s127 = sadd.s32 %s126, 1
      %p130 = scmp.eq.s32.totalorder %s17, 1
      %p131 = scmp.ne.s32.totalorder %s126, %s128
      %p132 = scmp.eq.s32.totalorder %s17, 0
      %p133 = por %p131, %p132
      %p134 = scmp.ne.s32.totalorder %s126, %s128
      %p135 = scmp.eq.s32.totalorder %s22, 1
      %p136 = por %p134, %p135
      %p137 = scmp.ne.s32.totalorder %s128, %s129
      %p138 = scmp.eq.s32.totalorder %s22, 0
      %p139 = por %p137, %p138
      %p140 = scmp.ne.s32.totalorder %s128, %s129
      %p141 = scmp.eq.s32.totalorder %s23, 1
      %p142 = por %p140, %p141
      %p144 = scmp.ne.s32.totalorder %s129, %s143
      %p145 = scmp.eq.s32.totalorder %s23, 0
      %p146 = por %p144, %p145
      %s148 = sadd.s32 %s147, 1
      %p151 = scmp.eq.s32.totalorder %s17, 1
      %p152 = scmp.ne.s32.totalorder %s147, %s149
      %p153 = scmp.eq.s32.totalorder %s17, 0
      %p154 = por %p152, %p153
      %p155 = scmp.ne.s32.totalorder %s147, %s149
      %p156 = scmp.eq.s32.totalorder %s22, 1
      %p157 = por %p155, %p156
      %p158 = scmp.ne.s32.totalorder %s149, %s150
      %p159 = scmp.eq.s32.totalorder %s22, 0
      %p160 = por %p158, %p159
      %p161 = scmp.ne.s32.totalorder %s149, %s150
      %p162 = scmp.eq.s32.totalorder %s23, 1
      %p163 = por %p161, %p162
      %p165 = scmp.ne.s32.totalorder %s150, %s164
      %p166 = scmp.eq.s32.totalorder %s23, 0
      %p167 = por %p165, %p166
      %s169 = sadd.s32 %s168, 1
      %p172 = scmp.eq.s32.totalorder %s17, 1
      %p173 = scmp.ne.s32.totalorder %s168, %s170
      %p174 = scmp.eq.s32.totalorder %s17, 0
      %p175 = por %p173, %p174
      %p176 = scmp.ne.s32.totalorder %s168, %s170
      %p177 = scmp.eq.s32.totalorder %s22, 1
      %p178 = por %p176, %p177
      %p179 = scmp.ne.s32.totalorder %s170, %s171
      %p180 = scmp.eq.s32.totalorder %s22, 0
      %p181 = por %p179, %p180
      %p182 = scmp.ne.s32.totalorder %s170, %s171
      %p183 = scmp.eq.s32.totalorder %s23, 1
      %p184 = por %p182, %p183
      %p186 = scmp.ne.s32.totalorder %s171, %s185
      %p187 = scmp.eq.s32.totalorder %s23, 0
      %p188 = por %p186, %p187
      %s189 = ssub.s32 %s24, %s36
      %p190 = scmp.eq.s32.totalorder %s189, 0
      %s192 = sadd.s32 %s191, 1
      %s193 = scalar_select %p190, %s191, %s192
      %p196 = pneg %p190
      %p197 = scmp.eq.s32.totalorder %s17, 1
      %p198 = por %p196, %p197
      %p199 = scmp.ne.s32.totalorder %s191, %s194
      %p200 = scmp.eq.s32.totalorder %s17, 0
      %p201 = por %p199, %p200
      %p202 = scmp.ne.s32.totalorder %s191, %s194
      %p203 = scmp.eq.s32.totalorder %s22, 1
      %p204 = por %p202, %p203
      %p205 = scmp.ne.s32.totalorder %s194, %s195
      %p206 = scmp.eq.s32.totalorder %s22, 0
      %p207 = por %p205, %p206
      %p208 = scmp.ne.s32.totalorder %s194, %s195
      %p209 = scmp.eq.s32.totalorder %s23, 1
      %p210 = por %p208, %p209
      %p212 = scmp.ne.s32.totalorder %s195, %s211
      %p213 = scmp.eq.s32.totalorder %s23, 0
      %p214 = por %p212, %p213
      %p215 = scmp.le.s32.totalorder 1, %s17
      %p216 = scmp.lt.s32.totalorder %s17, 3
      %p217 = pnand %p215, %p216
      %p218 = pneg %p217
      // Predicated region
      $region9: #{tpu_custom_call.1} parent=5 // pred_check
        _
      $region10: #{tpu_custom_call.1} parent=5 // pred_check_branch
        %220 = sbr.rel (%p217) target = $region12
      $region11: #{tpu_custom_call.1} parent=5 // pred_region
        %s221 = ssub.s32 %s17, 1
        // Predicated region
        $region13: #{tpu_custom_call.1} parent=11 // pred_check
          %p222 = pneg %p55
        $region14: #{tpu_custom_call.1} parent=11 // pred_check_branch
          %224 = sbr.rel (%p222) target = $region16
        $region15: #{tpu_custom_call.1} parent=11 // pred_region
          %s226 = ssub.s32 64, 64
          %227 = vsyncadd [#allocation4], %s226
          %s228 = smul.addr %s26, 64
          %s229 = scalar_lea.hbm %s0, %s228
          %s231 = sshll.u32 [#allocation3], 4
          %s232 = int_to_ptr.vmem [resolvable:$true] %s231
          %234 = dma.hbm_to_vmem [thread:$0]  %s229, 64, %s232, [#allocation4]
        $region16: #{tpu_custom_call.1} parent=11 // pred_fallthru
          _
        // Predicated region
        $region17: #{tpu_custom_call.1} parent=11 // pred_check
          %p235 = pneg %p76
        $region18: #{tpu_custom_call.1} parent=11 // pred_check_branch
          %237 = sbr.rel (%p235) target = $region20
        $region19: #{tpu_custom_call.1} parent=11 // pred_region
          %s239 = ssub.s32 256, 256
          %240 = vsyncadd [#allocation7], %s239
          %s241 = sshll.u32 [#allocation6], 4
          %s242 = int_to_ptr.vmem [resolvable:$true] %s241
          %247 = dma.hbm_to_vmem [thread:$0]  %s1, 256, %s242, [#allocation7], 64, 64, 4
        $region20: #{tpu_custom_call.1} parent=11 // pred_fallthru
          _
        // Predicated region
        $region21: #{tpu_custom_call.1} parent=11 // pred_check
          %p248 = pneg %p97
        $region22: #{tpu_custom_call.1} parent=11 // pred_check_branch
          %250 = sbr.rel (%p248) target = $region24
        $region23: #{tpu_custom_call.1} parent=11 // pred_region
          _
        $region24: #{tpu_custom_call.1} parent=11 // pred_fallthru
          _
        // Predicated region
        $region25: #{tpu_custom_call.1} parent=11 // pred_check
          %p251 = pneg %p118
        $region26: #{tpu_custom_call.1} parent=11 // pred_check_branch
          %253 = sbr.rel (%p251) target = $region28
        $region27: #{tpu_custom_call.1} parent=11 // pred_region
          %s255 = ssub.s32 512, 512
          %256 = vsyncadd [#allocation7], %s255
          %s257 = sshll.u32 [#allocation8], 4
          %s258 = int_to_ptr.vmem [resolvable:$true] %s257
          %263 = dma.hbm_to_vmem [thread:$0]  %s3, 512, %s258, [#allocation7], 64, 64, 4
        $region28: #{tpu_custom_call.1} parent=11 // pred_fallthru
          _
        // Predicated region
        $region29: #{tpu_custom_call.1} parent=11 // pred_check
          %p264 = pneg %p139
        $region30: #{tpu_custom_call.1} parent=11 // pred_check_branch
          %266 = sbr.rel (%p264) target = $region32
        $region31: #{tpu_custom_call.1} parent=11 // pred_region
          _
        $region32: #{tpu_custom_call.1} parent=11 // pred_fallthru
          _
        // Predicated region
        $region33: #{tpu_custom_call.1} parent=11 // pred_check
          %p267 = pneg %p160
        $region34: #{tpu_custom_call.1} parent=11 // pred_check_branch
          %269 = sbr.rel (%p267) target = $region36
        $region35: #{tpu_custom_call.1} parent=11 // pred_region
          %s271 = ssub.s32 256, 256
          %272 = vsyncadd [#allocation10], %s271
          %s273 = sshll.u32 [#allocation9], 4
          %s274 = int_to_ptr.vmem [resolvable:$true] %s273
          %279 = dma.hbm_to_vmem [thread:$0]  %s5, 256, %s274, [#allocation10], 64, 64, 4
        $region36: #{tpu_custom_call.1} parent=11 // pred_fallthru
          _
        // Predicated region
        $region37: #{tpu_custom_call.1} parent=11 // pred_check
          %p280 = pneg %p181
        $region38: #{tpu_custom_call.1} parent=11 // pred_check_branch
          %282 = sbr.rel (%p280) target = $region40
        $region39: #{tpu_custom_call.1} parent=11 // pred_region
          _
        $region40: #{tpu_custom_call.1} parent=11 // pred_fallthru
          _
      $region12: #{tpu_custom_call.1} parent=5 // pred_fallthru
        _
      %p283 = scmp.lt.s32.totalorder %s17, 2
      // Predicated region
      $region41: #{tpu_custom_call.1} parent=5 // pred_check
        %p284 = pneg %p283
      $region42: #{tpu_custom_call.1} parent=5 // pred_check_branch
        %286 = sbr.rel (%p284) target = $region44
      $region43: #{tpu_custom_call.1} parent=5 // pred_region
        _
      $region44: #{tpu_custom_call.1} parent=5 // pred_fallthru
        _
      %p287 = scmp.le.s32.totalorder 1, %s17
      %p288 = scmp.lt.s32.totalorder %s17, 3
      %p289 = pnand %p287, %p288
      %p290 = pneg %p289
      // Predicated region
      $region45: #{tpu_custom_call.1} parent=5 // pred_check
        _
      $region46: #{tpu_custom_call.1} parent=5 // pred_check_branch
        %292 = sbr.rel (%p289) target = $region48
      $region47: #{tpu_custom_call.1} parent=5 // pred_region
        %s293 = ssub.s32 %s17, 1
        // Predicated region
        $region49: #{tpu_custom_call.1} parent=47 // pred_check
          %p294 = pneg %p55
        $region50: #{tpu_custom_call.1} parent=47 // pred_check_branch
          %296 = sbr.rel (%p294) target = $region52
        $region51: #{tpu_custom_call.1} parent=47 // pred_region
          %297 = dma.done [#allocation4], 64
        $region52: #{tpu_custom_call.1} parent=47 // pred_fallthru
          _
        // Predicated region
        $region53: #{tpu_custom_call.1} parent=47 // pred_check
          %p298 = pneg %p76
        $region54: #{tpu_custom_call.1} parent=47 // pred_check_branch
          %300 = sbr.rel (%p298) target = $region56
        $region55: #{tpu_custom_call.1} parent=47 // pred_region
          %301 = dma.done [#allocation7], 256
        $region56: #{tpu_custom_call.1} parent=47 // pred_fallthru
          _
        // Predicated region
        $region57: #{tpu_custom_call.1} parent=47 // pred_check
          %p302 = pneg %p118
        $region58: #{tpu_custom_call.1} parent=47 // pred_check_branch
          %304 = sbr.rel (%p302) target = $region60
        $region59: #{tpu_custom_call.1} parent=47 // pred_region
          %305 = dma.done [#allocation7], 512
        $region60: #{tpu_custom_call.1} parent=47 // pred_fallthru
          _
        // Predicated region
        $region61: #{tpu_custom_call.1} parent=47 // pred_check
          %p306 = pneg %p160
        $region62: #{tpu_custom_call.1} parent=47 // pred_check_branch
          %308 = sbr.rel (%p306) target = $region64
        $region63: #{tpu_custom_call.1} parent=47 // pred_region
          %309 = dma.done [#allocation10], 256
        $region64: #{tpu_custom_call.1} parent=47 // pred_fallthru
          _
        %p310 = pneg %p55
        %p311 = pneg %p52
        %p312 = pneg %p76
        %p313 = pneg %p73
        %p314 = pneg %p97
        %p315 = pneg %p94
        %p316 = pneg %p118
        %p317 = pneg %p115
        %p318 = pneg %p139
        %p319 = pneg %p136
        %p320 = pneg %p160
        %p321 = pneg %p157
        %p322 = pneg %p181
        %p323 = pneg %p178
        %p324 = pneg %p207
        %p325 = pneg %p204
        %p327 = scmp.eq.s32.totalorder %s27, 0
        // Predicated region
        $region65: #{tpu_custom_call.1} parent=47 // pred_check
          %p328 = pneg %p327
        $region66: #{tpu_custom_call.1} parent=47 // pred_check_branch
          %330 = sbr.rel (%p328) target = $region68
        $region67: #{tpu_custom_call.1} parent=47 // pred_region
          %v331 = vld [vmem:[#allocation3] sm:$0xf]
          %v332 = vld [vmem:[#allocation6] sm:$0xf]
          %v333 = vld [vmem:[#allocation6 + $0x4] sm:$0xf]
          %v334 = vld [vmem:[#allocation6 + $0x8] sm:$0xf]
          %v335 = vld [vmem:[#allocation6 + $0xc] sm:$0xf]
          %v336 = vld [vmem:[%s2] sm:$0x1]
          %v338 = vlaneseq
          %v339 = vshrl.u32 %v338, 7
          %v340 = vsub.s32 0, %v339
          %v341 = vrot.slane %v336, %v340
          %v347 = vunpack.c.l.b16 %v332
          %v348 = vunpack.c.l.b16 %v333
          %v349 = vunpack.c.l.b16 %v334
          %v350 = vunpack.c.l.b16 %v335
          %v351 = vpack.c.b16 %v348, %v347
          %v352 = vpack.c.b16 %v350, %v349
          %vm355 = vcmask 261120
          %v357 = vsel %vm355, %v331, 0
          %359 = vmatprep.subr.bf16.mxu0 0
          %360 = vmatpush1.bf16.msra.mxu0 0
          %361 = vmatprep.subr.bf16.mxu0 0
          %362 = vmatpush1.bf16.msra.mxu0 0
          %363 = vmatprep.subr.bf16.mxu0 0
          %364 = vmatpush1.bf16.msra.mxu0 0
          %365 = vmatprep.subr.bf16.mxu0 0
          %366 = vmatpush1.bf16.msra.mxu0 0
          %367 = vmatprep.subr.bf16.mxu0 0
          %368 = vmatpush1.bf16.msra.mxu0 0
          %369 = vmatprep.subr.bf16.mxu0 0
          %370 = vmatpush1.bf16.msra.mxu0 0
          %371 = vmatprep.subr.bf16.mxu0 0
          %372 = vmatpush1.bf16.msra.mxu0 %v352
          %373 = vmatprep.subr.bf16.mxu0 0
          %374 = vmatpush1.bf16.msra.mxu0 %v351
          %375 = vmatprep.subr.bf16.mxu0 0
          %376 = vmatpush2.bf16.msra.mxu0 0
          %377 = vmatprep.subr.bf16.mxu0 0
          %378 = vmatpush2.bf16.msra.mxu0 0
          %379 = vmatprep.subr.bf16.mxu0 0
          %380 = vmatpush2.bf16.msra.mxu0 0
          %381 = vmatprep.subr.bf16.mxu0 0
          %382 = vmatpush2.bf16.msra.mxu0 0
          %383 = vmatprep.subr.bf16.mxu0 0
          %384 = vmatpush2.bf16.msra.mxu0 0
          %385 = vmatprep.subr.bf16.mxu0 0
          %386 = vmatpush2.bf16.msra.mxu0 0
          %387 = vmatprep.subr.bf16.mxu0 0
          %388 = vmatpush2.bf16.msra.mxu0 0
          %389 = vmatprep.subr.bf16.mxu0 0
          %390 = vmatpush2.bf16.msra.mxu0 0
          %391 = vmatprep.mubr.bf16.mxu0 0
          %392 = vmatmul.mubr.bf16.gmra.mxu0 %v357
          %v393 = vpop.f32.mrf.mxu0
          %v394 = vadd.f32 %v341, %v393
          %v395 = vpop.f32.mrf.mxu0
          %v396 = vpop.f32.mrf.mxu0
          %v397 = vpop.f32.mrf.mxu0
          %398 = vdwg.mxu0
          %v399 = vmax.f32 %v394, 0.0
          %v400 = vpack.c.bf16 %v399, %v399
          %vm401 = vcmask 257024
          %402 = vst.msk [vmem:[#allocation2] sm:$0xf] %vm401, %v400
        $region68: #{tpu_custom_call.1} parent=47 // pred_fallthru
          _
        %v403 = vld [vmem:[#allocation2] sm:$0xf]
        %s404 = smul.u32 %s27, 4
        %s405 = smul.addr %s404, 4
        %s406 = scalar_lea.vmem [#allocation8], %s405
        %v407 = vld [vmem:[%s406] sm:$0xf]
        %v408 = vld [vmem:[%s406 + $0x4] sm:$0xf]
        %v409 = vld [vmem:[%s406 + $0x8] sm:$0xf]
        %v410 = vld [vmem:[%s406 + $0xc] sm:$0xf]
        %s411 = scalar_lea.vmem %s4, %s27
        %v412 = vld [vmem:[%s411] sm:$0x1]
        %v414 = vlaneseq
        %v415 = vshrl.u32 %v414, 7
        %v416 = vsub.s32 0, %v415
        %v417 = vrot.slane %v412, %v416
        %v423 = vunpack.c.l.b16 %v407
        %v424 = vunpack.c.l.b16 %v408
        %v425 = vunpack.c.l.b16 %v409
        %v426 = vunpack.c.l.b16 %v410
        %v427 = vpack.c.b16 %v424, %v423
        %v428 = vpack.c.b16 %v426, %v425
        %vm431 = vcmask 261120
        %v433 = vsel %vm431, %v403, 0
        %435 = vmatprep.subr.bf16.mxu0 0
        %436 = vmatpush1.bf16.msra.mxu0 0
        %437 = vmatprep.subr.bf16.mxu0 0
        %438 = vmatpush1.bf16.msra.mxu0 0
        %439 = vmatprep.subr.bf16.mxu0 0
        %440 = vmatpush1.bf16.msra.mxu0 0
        %441 = vmatprep.subr.bf16.mxu0 0
        %442 = vmatpush1.bf16.msra.mxu0 0
        %443 = vmatprep.subr.bf16.mxu0 0
        %444 = vmatpush1.bf16.msra.mxu0 0
        %445 = vmatprep.subr.bf16.mxu0 0
        %446 = vmatpush1.bf16.msra.mxu0 0
        %447 = vmatprep.subr.bf16.mxu0 0
        %448 = vmatpush1.bf16.msra.mxu0 %v428
        %449 = vmatprep.subr.bf16.mxu0 0
        %450 = vmatpush1.bf16.msra.mxu0 %v427
        %451 = vmatprep.subr.bf16.mxu0 0
        %452 = vmatpush2.bf16.msra.mxu0 0
        %453 = vmatprep.subr.bf16.mxu0 0
        %454 = vmatpush2.bf16.msra.mxu0 0
        %455 = vmatprep.subr.bf16.mxu0 0
        %456 = vmatpush2.bf16.msra.mxu0 0
        %457 = vmatprep.subr.bf16.mxu0 0
        %458 = vmatpush2.bf16.msra.mxu0 0
        %459 = vmatprep.subr.bf16.mxu0 0
        %460 = vmatpush2.bf16.msra.mxu0 0
        %461 = vmatprep.subr.bf16.mxu0 0
        %462 = vmatpush2.bf16.msra.mxu0 0
        %463 = vmatprep.subr.bf16.mxu0 0
        %464 = vmatpush2.bf16.msra.mxu0 0
        %465 = vmatprep.subr.bf16.mxu0 0
        %466 = vmatpush2.bf16.msra.mxu0 0
        %467 = vmatprep.mubr.bf16.mxu0 0
        %468 = vmatmul.mubr.bf16.gmra.mxu0 %v433
        %v469 = vpop.f32.mrf.mxu0
        %v470 = vadd.f32 %v417, %v469
        %v471 = vpop.f32.mrf.mxu0
        %v472 = vpop.f32.mrf.mxu0
        %v473 = vpop.f32.mrf.mxu0
        %474 = vdwg.mxu0
        %v475 = vmax.f32 %v470, 0.0
        %v476 = vpack.c.bf16 %v475, %v475
        %vm477 = vcmask 257024
        %478 = vst.msk [vmem:[#allocation2] sm:$0xf] %vm477, %v476
        %p479 = scmp.eq.s32.totalorder %s27, 1
        // Predicated region
        $region69: #{tpu_custom_call.1} parent=47 // pred_check
          %p480 = pneg %p479
        $region70: #{tpu_custom_call.1} parent=47 // pred_check_branch
          %482 = sbr.rel (%p480) target = $region72
        $region71: #{tpu_custom_call.1} parent=47 // pred_region
          %v483 = vld [vmem:[#allocation2] sm:$0xf]
          %v484 = vld [vmem:[#allocation9] sm:$0xf]
          %v485 = vld [vmem:[#allocation9 + $0x4] sm:$0xf]
          %v486 = vld [vmem:[#allocation9 + $0x8] sm:$0xf]
          %v487 = vld [vmem:[#allocation9 + $0xc] sm:$0xf]
          %v488 = vld [vmem:[%s6] sm:$0x1]
          %v490 = vlaneseq
          %v491 = vshrl.u32 %v490, 7
          %v492 = vsub.s32 0, %v491
          %v493 = vrot.slane %v488, %v492
          %v499 = vunpack.c.l.b16 %v484
          %v500 = vunpack.c.l.b16 %v485
          %v501 = vunpack.c.l.b16 %v486
          %v502 = vunpack.c.l.b16 %v487
          %v503 = vpack.c.b16 %v500, %v499
          %v504 = vpack.c.b16 %v502, %v501
          %v508 = vsel %vm431, %v483, 0
          %510 = vmatprep.subr.bf16.mxu0 0
          %511 = vmatpush1.bf16.msra.mxu0 0
          %512 = vmatprep.subr.bf16.mxu0 0
          %513 = vmatpush1.bf16.msra.mxu0 0
          %514 = vmatprep.subr.bf16.mxu0 0
          %515 = vmatpush1.bf16.msra.mxu0 0
          %516 = vmatprep.subr.bf16.mxu0 0
          %517 = vmatpush1.bf16.msra.mxu0 0
          %518 = vmatprep.subr.bf16.mxu0 0
          %519 = vmatpush1.bf16.msra.mxu0 0
          %520 = vmatprep.subr.bf16.mxu0 0
          %521 = vmatpush1.bf16.msra.mxu0 0
          %522 = vmatprep.subr.bf16.mxu0 0
          %523 = vmatpush1.bf16.msra.mxu0 %v504
          %524 = vmatprep.subr.bf16.mxu0 0
          %525 = vmatpush1.bf16.msra.mxu0 %v503
          %526 = vmatprep.subr.bf16.mxu0 0
          %527 = vmatpush2.bf16.msra.mxu0 0
          %528 = vmatprep.subr.bf16.mxu0 0
          %529 = vmatpush2.bf16.msra.mxu0 0
          %530 = vmatprep.subr.bf16.mxu0 0
          %531 = vmatpush2.bf16.msra.mxu0 0
          %532 = vmatprep.subr.bf16.mxu0 0
          %533 = vmatpush2.bf16.msra.mxu0 0
          %534 = vmatprep.subr.bf16.mxu0 0
          %535 = vmatpush2.bf16.msra.mxu0 0
          %536 = vmatprep.subr.bf16.mxu0 0
          %537 = vmatpush2.bf16.msra.mxu0 0
          %538 = vmatprep.subr.bf16.mxu0 0
          %539 = vmatpush2.bf16.msra.mxu0 0
          %540 = vmatprep.subr.bf16.mxu0 0
          %541 = vmatpush2.bf16.msra.mxu0 0
          %542 = vmatprep.mubr.bf16.mxu0 0
          %543 = vmatmul.mubr.bf16.gmra.mxu0 %v508
          %v544 = vpop.f32.mrf.mxu0
          %v545 = vadd.f32 %v493, %v544
          %v546 = vpop.f32.mrf.mxu0
          %v547 = vpop.f32.mrf.mxu0
          %v548 = vpop.f32.mrf.mxu0
          %549 = vdwg.mxu0
          %550 = vst [vmem:[#allocation11] sm:$0xff] %v545
        $region72: #{tpu_custom_call.1} parent=47 // pred_fallthru
          _
        // Predicated region
        $region73: #{tpu_custom_call.1} parent=47 // pred_check
          %p551 = pneg %p204
        $region74: #{tpu_custom_call.1} parent=47 // pred_check_branch
          %553 = sbr.rel (%p551) target = $region76
        $region75: #{tpu_custom_call.1} parent=47 // pred_region
          %s555 = ssub.s32 128, 128
          %556 = vsyncadd [#allocation5], %s555
          %s557 = smul.addr %s26, 128
          %s558 = scalar_lea.hbm %s7, %s557
          %s560 = sshll.u32 [#allocation11], 4
          %s561 = int_to_ptr.vmem [resolvable:$true] %s560
          %563 = dma.vmem_to_hbm [thread:$0]  %s561, 128, %s558, [#allocation5]
        $region76: #{tpu_custom_call.1} parent=47 // pred_fallthru
          _
        // Predicated region
        $region77: #{tpu_custom_call.1} parent=47 // pred_check
          %p564 = pneg %p204
        $region78: #{tpu_custom_call.1} parent=47 // pred_check_branch
          %566 = sbr.rel (%p564) target = $region80
        $region79: #{tpu_custom_call.1} parent=47 // pred_region
          %567 = dma.done [#allocation5], 128
        $region80: #{tpu_custom_call.1} parent=47 // pred_fallthru
          _
      $region48: #{tpu_custom_call.1} parent=5 // pred_fallthru
        _
      %p568 = scmp.le.s32.totalorder 2, %s17
      // Predicated region
      $region81: #{tpu_custom_call.1} parent=5 // pred_check
        %p569 = pneg %p568
      $region82: #{tpu_custom_call.1} parent=5 // pred_check_branch
        %571 = sbr.rel (%p569) target = $region84
      $region83: #{tpu_custom_call.1} parent=5 // pred_region
        %s572 = ssub.s32 %s17, 2
      $region84: #{tpu_custom_call.1} parent=5 // pred_fallthru
        _
    $region6: #{tpu_custom_call.1} parent=1 // loop_footer
      %s21 = sadd.s32 1, %s17
    $region7: #{tpu_custom_call.1} parent=1 // loop_footer_branch
      %16 = sbr.rel target = $region3
    $region8: #{tpu_custom_call.1} parent=1 // loop_exit
      _
    %573 = vsyncpa [#allocation4], 1
    %s574 = scalar_lea.sflag [#allocation4], 1
    %575 = vsyncpa %s574, 1
    %576 = vsyncpa [#allocation7], 1
    %577 = vsyncpa [#allocation10], 1
    %578 = vsyncpa [#allocation5], 1
    %s579 = scalar_lea.sflag [#allocation5], 1
    %580 = vsyncpa %s579, 1

</llo_original>
